<compile_context>
chip_gen: v7x
topology: tpu7x:2x2x1
jax: 0.10.0
libtpu: 0.0.40
codegen_flags: <defaults>
</compile_context>

<pallas_src>
import jax
import jax.numpy as jnp
from jax.experimental import pallas as pl
from jax.experimental.pallas import tpu as pltpu


def _round_up(a: int, b: int) -> int:
    return ((a + b - 1) // b) * b


def _cdiv(a: int, b: int) -> int:
    return (a + b - 1) // b


def _gate_kernel(x_ref, y_ref, w_ref, b_ref, o_ref):
    d = o_ref.shape[-1]
    # One fused MXU matmul: (TM, D) @ (D, 2D) -> (TM, 2D), f32 accumulation.
    z = jnp.dot(y_ref[...], w_ref[...], preferred_element_type=jnp.float32)
    z = z + b_ref[...].astype(jnp.float32)          # second half of bias is 0
    gate = jax.nn.sigmoid(z[:, :d])                  # EUP
    cand = jnp.tanh(z[:, d:])                        # EUP
    # out = x + gate * cand  (VPU blend)
    o_ref[...] = (x_ref[...].astype(jnp.float32) + gate * cand).astype(o_ref.dtype)


def fuse_gate_params(w1, b1, w2):
    """Build the fused RHS once, at parameter-load time (hoists the transposes
    and the concat off the per-call path).

    w1: (D, D) PyTorch nn.Linear weight (out, in) of transform1.
    b1: (D,)   bias of transform1.
    w2: (D, D) weight of transform2 (no bias).
    Returns (w_fused, b_fused): (D, 2D) and (1, 2D).
    """
    D = w1.shape[0]
    w_fused = jnp.concatenate([w1.T, w2.T], axis=1)                       # (D, 2D)
    b_fused = jnp.concatenate([b1, jnp.zeros((D,), b1.dtype)]).reshape(1, 2 * D)
    return w_fused, b_fused


def sigmoid_tanh_gate(x, y, w_fused, b_fused, *, block_rows=512):
    """Pallas implementation of SigmoidTanhGateLayer.forward(x, y)."""
    assert x.shape == y.shape and x.dtype == y.dtype
    orig_shape = x.shape
    D = orig_shape[-1]
    assert w_fused.shape == (D, 2 * D) and b_fused.shape == (1, 2 * D)

    M = 1
    for d in orig_shape[:-1]:
        M *= d
    x2 = x.reshape(M, D)
    y2 = y.reshape(M, D)

    # Row tile: multiple of 8 sublanes; no wrapper padding — Pallas masks the
    # ragged last row block (garbage in masked rows is never stored).
    tm = min(block_rows, _round_up(M, 8))
    tm = _round_up(max(tm, 8), 8)
    # Ensure >= 2 row tiles when there's enough work (v7x megacore sharding).
    if M > 8 and _cdiv(M, tm) < 2:
        tm = _round_up(_cdiv(M, 2), 8)

    itemsize = jnp.dtype(x.dtype).itemsize
    weight_bytes = (w_fused.size * jnp.dtype(w_fused.dtype).itemsize
                    + b_fused.size * jnp.dtype(b_fused.dtype).itemsize)

    def vmem_need(rows):
        # single-buffered weights/bias + double-buffered (rows, D) x/y/out tiles
        return weight_bytes + 3 * 2 * rows * D * itemsize

    while tm > 8 and vmem_need(tm) > 48 * 1024 * 1024:
        tm = max(8, _round_up(tm // 2, 8))
    # TODO(synk): for D large enough that the resident (D, 2D) f32 weight alone
    # exceeds ~48 MiB (D >= ~2.5k), add a second grid axis over the output dim
    # (weight BlockSpec (D, TN), bias (1, TN)) or cast weights to bf16 so the
    # kernel still fits v7x's 64 MiB VMEM.

    vmem_limit = int(min(max(vmem_need(tm) * 2 + (4 << 20), 32 << 20), 56 << 20))

    grid = (_cdiv(M, tm),)

    out2 = pl.pallas_call(
        _gate_kernel,
        out_shape=jax.ShapeDtypeStruct((M, D), x.dtype),
        grid_spec=pltpu.PrefetchScalarGridSpec(
            num_scalar_prefetch=0,
            grid=grid,
            in_specs=[
                pl.BlockSpec((tm, D), lambda i: (i, 0)),            # x tile
                pl.BlockSpec((tm, D), lambda i: (i, 0)),            # y tile
                pl.BlockSpec((D, 2 * D), lambda i: (0, 0),
                             pipeline_mode=pl.Buffered(1)),          # [W1^T | W2^T] resident
                pl.BlockSpec((1, 2 * D), lambda i: (0, 0),
                             pipeline_mode=pl.Buffered(1)),          # [b1 | 0] resident
            ],
            out_specs=pl.BlockSpec((tm, D), lambda i: (i, 0)),
        ),
        compiler_params=pltpu.CompilerParams(
            dimension_semantics=("parallel",),
            vmem_limit_bytes=vmem_limit,
        ),
    )(x2, y2, w_fused, b_fused)

    return out2.reshape(orig_shape)


if __name__ == "__main__":
    key = jax.random.PRNGKey(0)
    kx, ky, kw1, kb1, kw2 = jax.random.split(key, 5)

    # Small shapes consistent with the module: batch=2, seq=8, hidden=32.
    B, S, D = 2, 8, 32
    x = jax.random.normal(kx, (B, S, D), dtype=jnp.float32)
    y = jax.random.normal(ky, (B, S, D), dtype=jnp.float32)
    # PyTorch nn.Linear parameter layout: weight is (out_features, in_features).
    w1 = jax.random.normal(kw1, (D, D), dtype=jnp.float32) * 0.1
    b1 = jax.random.normal(kb1, (D,), dtype=jnp.float32) * 0.1
    w2 = jax.random.normal(kw2, (D, D), dtype=jnp.float32) * 0.1

    # Fuse/transpose the weights ONCE (parameter-load time), then call the kernel.
    w_fused, b_fused = fuse_gate_params(w1, b1, w2)
    out = sigmoid_tanh_gate(x, y, w_fused, b_fused)
    out = jax.block_until_ready(out)

    # fp32 reference (same semantics as the PyTorch module).
    hi = jax.lax.Precision.HIGHEST
    ref = x + jax.nn.sigmoid(
        jnp.matmul(y, w1.T, precision=hi) + b1
    ) * jnp.tanh(jnp.matmul(y, w2.T, precision=hi))

    assert out.shape == x.shape and out.dtype == x.dtype
    max_err = float(jnp.max(jnp.abs(out - ref)))
    # Kernel uses default (single-pass bf16) MXU precision with f32 accumulation,
    # so compare at bf16-level tolerance against the fp32 reference.
    assert max_err < 3e-2, f"max_err={max_err}"

    print("KERNEL_OK")
</pallas_src>

<mosaic_0001>
module attributes {stable_mosaic.version = 11 : i64} {
  func.func @_gate_kernel(%arg0: i32, %arg1: memref<8x32xf32, #tpu.memory_space<vmem>>, %arg2: memref<8x32xf32, #tpu.memory_space<vmem>>, %arg3: memref<32x64xf32, #tpu.memory_space<vmem>>, %arg4: memref<1x64xf32, #tpu.memory_space<vmem>>, %arg5: memref<8x32xf32, #tpu.memory_space<vmem>>) attributes {dimension_semantics = [#tpu.dimension_semantics<parallel>], iteration_bounds = array<i64: 2>, scalar_prefetch = 0 : i64, scratch_operands = 0 : i64, tpu.core_type = #tpu.core_type<tc>, window_params = [{transform_indices = @transform_0, window_bounds = array<i64: 8, 32>}, {transform_indices = @transform_1, window_bounds = array<i64: 8, 32>}, {pipeline_mode = #tpu.pipeline_mode<synchronous>, transform_indices = @transform_2, window_bounds = array<i64: 32, 64>}, {pipeline_mode = #tpu.pipeline_mode<synchronous>, transform_indices = @transform_3, window_bounds = array<i64: 1, 64>}, {transform_indices = @transform_4, window_bounds = array<i64: 8, 32>}]} {
    %c0 = arith.constant 0 : index
    %c0_0 = arith.constant 0 : index
    %0 = vector.load %arg2[%c0, %c0_0] : memref<8x32xf32, #tpu.memory_space<vmem>>, vector<8x32xf32>
    %c0_1 = arith.constant 0 : index
    %c0_2 = arith.constant 0 : index
    %1 = vector.load %arg3[%c0_1, %c0_2] : memref<32x64xf32, #tpu.memory_space<vmem>>, vector<32x64xf32>
    %cst = arith.constant dense<0.000000e+00> : vector<8x64xf32>
    %2 = tpu.matmul %0, %1, %cst {dimension_numbers = #tpu.dot_dimension_numbers<[1], [0], [0], [1], [0, 0, 1, 1], [], []>} : vector<8x32xf32>, vector<32x64xf32>, vector<8x64xf32> -> vector<8x64xf32>
    %c0_3 = arith.constant 0 : index
    %c0_4 = arith.constant 0 : index
    %3 = vector.load %arg4[%c0_3, %c0_4] : memref<1x64xf32, #tpu.memory_space<vmem>>, vector<1x64xf32>
    %4 = vector.broadcast %3 : vector<1x64xf32> to vector<8x64xf32>
    %5 = arith.addf %2, %4 : vector<8x64xf32>
    %6 = vector.extract_strided_slice %5 {offsets = [0, 0], sizes = [8, 32], strides = [1, 1]} : vector<8x64xf32> to vector<8x32xf32>
    %7 = arith.negf %6 : vector<8x32xf32>
    %8 = math.exp %7 : vector<8x32xf32>
    %cst_5 = arith.constant 1.000000e+00 : f32
    %9 = vector.broadcast %cst_5 : f32 to vector<8x32xf32>
    %10 = arith.addf %9, %8 : vector<8x32xf32>
    %11 = arith.divf %9, %10 : vector<8x32xf32>
    %12 = vector.extract_strided_slice %5 {offsets = [0, 32], sizes = [8, 32], strides = [1, 1]} : vector<8x64xf32> to vector<8x32xf32>
    %13 = math.tanh %12 : vector<8x32xf32>
    %c0_6 = arith.constant 0 : index
    %c0_7 = arith.constant 0 : index
    %14 = vector.load %arg1[%c0_6, %c0_7] : memref<8x32xf32, #tpu.memory_space<vmem>>, vector<8x32xf32>
    %15 = arith.mulf %11, %13 : vector<8x32xf32>
    %16 = arith.addf %14, %15 : vector<8x32xf32>
    %c0_8 = arith.constant 0 : index
    %c0_9 = arith.constant 0 : index
    %17 = vector.load %arg5[%c0_8, %c0_9] : memref<8x32xf32, #tpu.memory_space<vmem>>, vector<8x32xf32>
    tpu.vector_store %arg5[%c0_8, %c0_9], %16 {strides = array<i32>} : memref<8x32xf32, #tpu.memory_space<vmem>>, vector<8x32xf32>,
    return
  }
  func.func @transform_0(%arg0: i32) -> (i32, i32) {
    %c0_i32 = arith.constant 0 : i32
    %c0_i32_0 = arith.constant 0 : i32
    return %arg0, %c0_i32 : i32, i32
  }
  func.func @transform_1(%arg0: i32) -> (i32, i32) {
    %c0_i32 = arith.constant 0 : i32
    %c0_i32_0 = arith.constant 0 : i32
    return %arg0, %c0_i32 : i32, i32
  }
  func.func @transform_2(%arg0: i32) -> (i32, i32) {
    %c0_i32 = arith.constant 0 : i32
    %c0_i32_0 = arith.constant 0 : i32
    %c0_i32_1 = arith.constant 0 : i32
    return %c0_i32, %c0_i32_0 : i32, i32
  }
  func.func @transform_3(%arg0: i32) -> (i32, i32) {
    %c0_i32 = arith.constant 0 : i32
    %c0_i32_0 = arith.constant 0 : i32
    %c0_i32_1 = arith.constant 0 : i32
    return %c0_i32, %c0_i32_0 : i32, i32
  }
  func.func @transform_4(%arg0: i32) -> (i32, i32) {
    %c0_i32 = arith.constant 0 : i32
    %c0_i32_0 = arith.constant 0 : i32
    return %arg0, %c0_i32 : i32, i32
  }
}

</mosaic_0001>

<llo_original>
// kernel: tpu_custom_call.1
$region0: #{tpu_custom_call.1}
  #allocation0 [shape = 'u32[]', space=smem, size = 0x4, offset = 0x4, fixed_abs, tag = 'smem constant byte address 0x4 - core index']
  #allocation1 [shape = 'u32[144,128]{1,0:T(1,128)}', space=vmem, size = 0x12000, scoped, tag = 'internal scratch']
  %s0 = inlined_call_operand.hbm [shape: f32[16,32], index: 0, kind: input, shape index: {}]
  %s1 = inlined_call_operand.hbm [shape: f32[16,32], index: 1, kind: input, shape index: {}]
  %s2 = inlined_call_operand.hbm [shape: f32[32,64], index: 2, kind: input, shape index: {}]
  %s3 = inlined_call_operand.vmem [shape: f32[1,64], index: 3, kind: input, shape index: {}]
  %s4 = inlined_call_operand.hbm [shape: f32[16,32], index: 4, kind: output, shape index: {}]
  %s5 = sld [smem:[#allocation0]]
  $region61: #{tpu_custom_call.1} parent=0
    _
  %s7 = ssub.s32 1, %s5
  %s8 = scalar_select 0, %s7, %s5
  $region1: #{tpu_custom_call.1} parent=0
    #allocation2 [shape = 'u8[8192]{0}', space=vmem, size = 0x2000, scoped, tag = 'input window, operand 0']
    #allocation3 [shape = 's32[2]{0}', space=sflag, size = 0x8, scoped, tag = 'scoped memory for tpu_custom_call.1']
    #allocation4 [shape = 's32[2]{0}', space=sflag, size = 0x8, scoped, tag = 'scoped memory for tpu_custom_call.1']
    #allocation5 [shape = 'u8[8192]{0}', space=vmem, size = 0x2000, scoped, tag = 'input window, operand 1']
    #allocation6 [shape = 's32[2]{0}', space=sflag, size = 0x8, scoped, tag = 'scoped memory for tpu_custom_call.1']
    #allocation7 [shape = 'u8[16384]{0}', space=vmem, size = 0x4000, scoped, tag = 'input window, operand 2, single buffered']
    #allocation8 [shape = 'u8[8192]{0}', space=vmem, size = 0x2000, scoped, tag = 'output window, operand 0']
    %9 = vsyncpa [#allocation3], 0
    %s10 = scalar_lea.sflag [#allocation3], 1
    %11 = vsyncpa %s10, 0
    %12 = vsyncpa [#allocation6], 0
    %s13 = scalar_lea.sflag [#allocation6], 1
    %14 = vsyncpa %s13, 0
    %15 = vsyncpa [#allocation4], 0
    %s16 = scalar_lea.sflag [#allocation4], 1
    %17 = vsyncpa %s16, 0
    loop: start=0, step=1, limit=4
    $region2: #{tpu_custom_call.1} parent=1 // loop_pre_header
      _
    $region3: #{tpu_custom_call.1} parent=1 // loop_header
      %s19 = sphi 0, %s23
      %p20 = scmp.ge.s32.totalorder %s19, 4
      %s29 = sphi 0, %s31
      %s32 = sphi 0, %s29
      %s33 = sphi 0, %s32
      %s49 = sphi 0, %s33
      %s55 = sphi 0, %s57
      %s58 = sphi 0, %s55
      %s59 = sphi 0, %s58
      %s75 = sphi 0, %s59
      %s79 = sphi 0, %s79
      %s81 = sphi 0, %s79
      %s82 = sphi 0, %s81
      %s96 = sphi 0, %s82
      %s100 = sphi 0, %s100
      %s102 = sphi 0, %s100
      %s103 = sphi 0, %s102
      %s117 = sphi 0, %s103
      %s123 = sphi 0, %s125
      %s126 = sphi 0, %s123
      %s127 = sphi 0, %s126
      %s143 = sphi 0, %s127
    $region4: #{tpu_custom_call.1} parent=1 // loop_header_branch
      %22 = sbr.rel (%p20) target = $region8
    $region5: #{tpu_custom_call.1} parent=1 // loop_body
      %s24 = ssub.s32 %s19, 1
      %s25 = ssub.s32 %s19, 2
      %s26 = sadd.s32 %s19, 1
      %s27 = ssub.s32 %s19, %s26
      %p28 = scmp.eq.s32.totalorder %s27, 0
      %s30 = sadd.s32 %s29, 1
      %s31 = scalar_select %p28, %s29, %s30
      %p34 = pneg %p28
      %p35 = scmp.eq.s32.totalorder %s19, 1
      %p36 = por %p34, %p35
      %p37 = scmp.ne.s32.totalorder %s29, %s32
      %p38 = scmp.eq.s32.totalorder %s19, 0
      %p39 = por %p37, %p38
      %p40 = scmp.ne.s32.totalorder %s29, %s32
      %p41 = scmp.eq.s32.totalorder %s24, 1
      %p42 = por %p40, %p41
      %p43 = scmp.ne.s32.totalorder %s32, %s33
      %p44 = scmp.eq.s32.totalorder %s24, 0
      %p45 = por %p43, %p44
      %p46 = scmp.ne.s32.totalorder %s32, %s33
      %p47 = scmp.eq.s32.totalorder %s25, 1
      %p48 = por %p46, %p47
      %p50 = scmp.ne.s32.totalorder %s33, %s49
      %p51 = scmp.eq.s32.totalorder %s25, 0
      %p52 = por %p50, %p51
      %s53 = ssub.s32 %s19, %s26
      %p54 = scmp.eq.s32.totalorder %s53, 0
      %s56 = sadd.s32 %s55, 1
      %s57 = scalar_select %p54, %s55, %s56
      %p60 = pneg %p54
      %p61 = scmp.eq.s32.totalorder %s19, 1
      %p62 = por %p60, %p61
      %p63 = scmp.ne.s32.totalorder %s55, %s58
      %p64 = scmp.eq.s32.totalorder %s19, 0
      %p65 = por %p63, %p64
      %p66 = scmp.ne.s32.totalorder %s55, %s58
      %p67 = scmp.eq.s32.totalorder %s24, 1
      %p68 = por %p66, %p67
      %p69 = scmp.ne.s32.totalorder %s58, %s59
      %p70 = scmp.eq.s32.totalorder %s24, 0
      %p71 = por %p69, %p70
      %p72 = scmp.ne.s32.totalorder %s58, %s59
      %p73 = scmp.eq.s32.totalorder %s25, 1
      %p74 = por %p72, %p73
      %p76 = scmp.ne.s32.totalorder %s59, %s75
      %p77 = scmp.eq.s32.totalorder %s25, 0
      %p78 = por %p76, %p77
      %s80 = sadd.s32 %s79, 1
      %p83 = scmp.eq.s32.totalorder %s19, 1
      %p84 = scmp.ne.s32.totalorder %s79, %s81
      %p85 = scmp.eq.s32.totalorder %s19, 0
      %p86 = por %p84, %p85
      %p87 = scmp.ne.s32.totalorder %s79, %s81
      %p88 = scmp.eq.s32.totalorder %s24, 1
      %p89 = por %p87, %p88
      %p90 = scmp.ne.s32.totalorder %s81, %s82
      %p91 = scmp.eq.s32.totalorder %s24, 0
      %p92 = por %p90, %p91
      %p93 = scmp.ne.s32.totalorder %s81, %s82
      %p94 = scmp.eq.s32.totalorder %s25, 1
      %p95 = por %p93, %p94
      %p97 = scmp.ne.s32.totalorder %s82, %s96
      %p98 = scmp.eq.s32.totalorder %s25, 0
      %p99 = por %p97, %p98
      %s101 = sadd.s32 %s100, 1
      %p104 = scmp.eq.s32.totalorder %s19, 1
      %p105 = scmp.ne.s32.totalorder %s100, %s102
      %p106 = scmp.eq.s32.totalorder %s19, 0
      %p107 = por %p105, %p106
      %p108 = scmp.ne.s32.totalorder %s100, %s102
      %p109 = scmp.eq.s32.totalorder %s24, 1
      %p110 = por %p108, %p109
      %p111 = scmp.ne.s32.totalorder %s102, %s103
      %p112 = scmp.eq.s32.totalorder %s24, 0
      %p113 = por %p111, %p112
      %p114 = scmp.ne.s32.totalorder %s102, %s103
      %p115 = scmp.eq.s32.totalorder %s25, 1
      %p116 = por %p114, %p115
      %p118 = scmp.ne.s32.totalorder %s103, %s117
      %p119 = scmp.eq.s32.totalorder %s25, 0
      %p120 = por %p118, %p119
      %s121 = ssub.s32 %s19, %s26
      %p122 = scmp.eq.s32.totalorder %s121, 0
      %s124 = sadd.s32 %s123, 1
      %s125 = scalar_select %p122, %s123, %s124
      %p128 = pneg %p122
      %p129 = scmp.eq.s32.totalorder %s19, 1
      %p130 = por %p128, %p129
      %p131 = scmp.ne.s32.totalorder %s123, %s126
      %p132 = scmp.eq.s32.totalorder %s19, 0
      %p133 = por %p131, %p132
      %p134 = scmp.ne.s32.totalorder %s123, %s126
      %p135 = scmp.eq.s32.totalorder %s24, 1
      %p136 = por %p134, %p135
      %p137 = scmp.ne.s32.totalorder %s126, %s127
      %p138 = scmp.eq.s32.totalorder %s24, 0
      %p139 = por %p137, %p138
      %p140 = scmp.ne.s32.totalorder %s126, %s127
      %p141 = scmp.eq.s32.totalorder %s25, 1
      %p142 = por %p140, %p141
      %p144 = scmp.ne.s32.totalorder %s127, %s143
      %p145 = scmp.eq.s32.totalorder %s25, 0
      %p146 = por %p144, %p145
      %p147 = scmp.le.s32.totalorder 1, %s19
      %p148 = scmp.lt.s32.totalorder %s19, 3
      %p149 = pnand %p147, %p148
      %p150 = pneg %p149
      // Predicated region
      $region9: #{tpu_custom_call.1} parent=5 // pred_check
        _
      $region10: #{tpu_custom_call.1} parent=5 // pred_check_branch
        %152 = sbr.rel (%p149) target = $region12
      $region11: #{tpu_custom_call.1} parent=5 // pred_region
        %s153 = ssub.s32 %s19, 1
        // Predicated region
        $region13: #{tpu_custom_call.1} parent=11 // pred_check
          %p154 = pneg %p92
        $region14: #{tpu_custom_call.1} parent=11 // pred_check_branch
          %156 = sbr.rel (%p154) target = $region16
        $region15: #{tpu_custom_call.1} parent=11 // pred_region
          %s158 = ssub.s32 512, 512
          %159 = vsyncadd [#allocation6], %s158
          %s160 = sshll.u32 [#allocation7], 4
          %s161 = int_to_ptr.vmem [resolvable:$true] %s160
          %166 = dma.hbm_to_vmem [thread:$0]  %s2, 512, %s161, [#allocation6], 128, 128, 8
        $region16: #{tpu_custom_call.1} parent=11 // pred_fallthru
          _
        // Predicated region
        $region17: #{tpu_custom_call.1} parent=11 // pred_check
          %p167 = pneg %p113
        $region18: #{tpu_custom_call.1} parent=11 // pred_check_branch
          %169 = sbr.rel (%p167) target = $region20
        $region19: #{tpu_custom_call.1} parent=11 // pred_region
          _
        $region20: #{tpu_custom_call.1} parent=11 // pred_fallthru
          _
      $region12: #{tpu_custom_call.1} parent=5 // pred_fallthru
        _
      %p170 = scmp.lt.s32.totalorder %s19, 2
      // Predicated region
      $region21: #{tpu_custom_call.1} parent=5 // pred_check
        %p171 = pneg %p170
      $region22: #{tpu_custom_call.1} parent=5 // pred_check_branch
        %173 = sbr.rel (%p171) target = $region24
      $region23: #{tpu_custom_call.1} parent=5 // pred_region
        // Predicated region
        $region25: #{tpu_custom_call.1} parent=23 // pred_check
          %p174 = pneg %p39
        $region26: #{tpu_custom_call.1} parent=23 // pred_check_branch
          %176 = sbr.rel (%p174) target = $region28
        $region27: #{tpu_custom_call.1} parent=23 // pred_region
          %s177 = sand.u32 %s29, 1
          %s178 = scalar_lea.sflag [#allocation3], %s177
          %s179 = sand.u32 %s29, 1
          %s180 = smul.addr %s179, 8
          %s181 = scalar_lea.vmem [#allocation2], %s180
          %s183 = ssub.s32 128, 128
          %184 = vsyncadd %s178, %s183
          %s185 = smul.addr %s19, 128
          %s186 = scalar_lea.hbm %s0, %s185
          %s188 = sshll.u32 %s181, 4
          %s189 = int_to_ptr.vmem [resolvable:$true] %s188
          %191 = dma.hbm_to_vmem [thread:$0]  %s186, 128, %s189, %s178
        $region28: #{tpu_custom_call.1} parent=23 // pred_fallthru
          _
        // Predicated region
        $region29: #{tpu_custom_call.1} parent=23 // pred_check
          %p192 = pneg %p65
        $region30: #{tpu_custom_call.1} parent=23 // pred_check_branch
          %194 = sbr.rel (%p192) target = $region32
        $region31: #{tpu_custom_call.1} parent=23 // pred_region
          %s195 = sand.u32 %s19, 1
          %s196 = scalar_lea.sflag [#allocation6], %s195
          %s197 = sand.u32 %s55, 1
          %s198 = smul.addr %s197, 8
          %s199 = scalar_lea.vmem [#allocation5], %s198
          %s201 = ssub.s32 128, 128
          %202 = vsyncadd %s196, %s201
          %s203 = smul.addr %s19, 128
          %s204 = scalar_lea.hbm %s1, %s203
          %s206 = sshll.u32 %s199, 4
          %s207 = int_to_ptr.vmem [resolvable:$true] %s206
          %209 = dma.hbm_to_vmem [thread:$0]  %s204, 128, %s207, %s196
        $region32: #{tpu_custom_call.1} parent=23 // pred_fallthru
          _
      $region24: #{tpu_custom_call.1} parent=5 // pred_fallthru
        _
      %p210 = scmp.le.s32.totalorder 1, %s19
      %p211 = scmp.lt.s32.totalorder %s19, 3
      %p212 = pnand %p210, %p211
      %p213 = pneg %p212
      // Predicated region
      $region33: #{tpu_custom_call.1} parent=5 // pred_check
        _
      $region34: #{tpu_custom_call.1} parent=5 // pred_check_branch
        %215 = sbr.rel (%p212) target = $region36
      $region35: #{tpu_custom_call.1} parent=5 // pred_region
        %s216 = ssub.s32 %s19, 1
        %s217 = sand.u32 %s32, 1
        %s218 = scalar_lea.sflag [#allocation3], %s217
        %s219 = sand.u32 %s32, 1
        %s220 = smul.addr %s219, 8
        %s221 = scalar_lea.vmem [#allocation2], %s220
        // Predicated region
        $region37: #{tpu_custom_call.1} parent=35 // pred_check
          %p222 = pneg %p45
        $region38: #{tpu_custom_call.1} parent=35 // pred_check_branch
          %224 = sbr.rel (%p222) target = $region40
        $region39: #{tpu_custom_call.1} parent=35 // pred_region
          %225 = dma.done %s218, 128
        $region40: #{tpu_custom_call.1} parent=35 // pred_fallthru
          _
        %s226 = sand.u32 %s24, 1
        %s227 = scalar_lea.sflag [#allocation6], %s226
        %s228 = sand.u32 %s58, 1
        %s229 = smul.addr %s228, 8
        %s230 = scalar_lea.vmem [#allocation5], %s229
        // Predicated region
        $region41: #{tpu_custom_call.1} parent=35 // pred_check
          %p231 = pneg %p71
        $region42: #{tpu_custom_call.1} parent=35 // pred_check_branch
          %233 = sbr.rel (%p231) target = $region44
        $region43: #{tpu_custom_call.1} parent=35 // pred_region
          %234 = dma.done %s227, 128
        $region44: #{tpu_custom_call.1} parent=35 // pred_fallthru
          _
        // Predicated region
        $region45: #{tpu_custom_call.1} parent=35 // pred_check
          %p235 = pneg %p92
        $region46: #{tpu_custom_call.1} parent=35 // pred_check_branch
          %237 = sbr.rel (%p235) target = $region48
        $region47: #{tpu_custom_call.1} parent=35 // pred_region
          %238 = dma.done [#allocation6], 512
        $region48: #{tpu_custom_call.1} parent=35 // pred_fallthru
          _
        %s239 = sand.u32 %s32, 1
        %s240 = scalar_lea.sflag [#allocation3], %s239
        %s241 = sand.u32 %s32, 1
        %s242 = smul.addr %s241, 8
        %s243 = scalar_lea.vmem [#allocation2], %s242
        %p244 = pneg %p45
        %p245 = pneg %p42
        %s246 = sand.u32 %s24, 1
        %s247 = scalar_lea.sflag [#allocation6], %s246
        %s248 = sand.u32 %s58, 1
        %s249 = smul.addr %s248, 8
        %s250 = scalar_lea.vmem [#allocation5], %s249
        %p251 = pneg %p71
        %p252 = pneg %p68
        %p253 = pneg %p92
        %p254 = pneg %p89
        %p255 = pneg %p113
        %p256 = pneg %p110
        %p257 = pneg %p139
        %p258 = pneg %p136
        %s259 = sand.u32 %s126, 1
        %s260 = scalar_lea.sflag [#allocation4], %s259
        %s261 = sand.u32 %s126, 1
        %s262 = smul.addr %s261, 8
        %s263 = scalar_lea.vmem [#allocation8], %s262
        %v264 = vld [vmem:[%s230] sm:$0xff]
        %v265 = vld [vmem:[#allocation7] sm:$0xff]
        %v266 = vld [vmem:[#allocation7 + $0x8] sm:$0xff]
        %v267 = vld [vmem:[#allocation7 + $0x10] sm:$0xff]
        %v268 = vld [vmem:[#allocation7 + $0x18] sm:$0xff]
        %v269 = vld [vmem:[%s3] sm:$0x1]
        %v271 = vlaneseq
        %v272 = vshrl.u32 %v271, 7
        %v273 = vsub.s32 0, %v272
        %v274 = vrot.slane %v269, %v273
        %vm276 = vcmask 261120
        %v278 = vsel %vm276, %v264, 0
        %280 = vmatprep.subr.mxu0 0.0
        %281 = vmatpush1.msra.mxu0 %v265
        %282 = vmatprep.subr.mxu0 0.0
        %283 = vmatpush1.msra.mxu0 %v266
        %284 = vmatprep.subr.mxu0 0.0
        %285 = vmatpush1.msra.mxu0 %v267
        %286 = vmatprep.subr.mxu0 0.0
        %287 = vmatpush1.msra.mxu0 %v268
        %288 = vmatprep.subr.mxu0 0.0
        %289 = vmatpush1.msra.mxu0 0.0
        %290 = vmatprep.subr.mxu0 0.0
        %291 = vmatpush1.msra.mxu0 0.0
        %292 = vmatprep.subr.mxu0 0.0
        %293 = vmatpush1.msra.mxu0 0.0
        %294 = vmatprep.subr.mxu0 0.0
        %295 = vmatpush1.msra.mxu0 0.0
        %296 = vmatprep.subr.mxu0 0.0
        %297 = vmatpush1.msra.mxu0 0.0
        %298 = vmatprep.subr.mxu0 0.0
        %299 = vmatpush1.msra.mxu0 0.0
        %300 = vmatprep.subr.mxu0 0.0
        %301 = vmatpush1.msra.mxu0 0.0
        %302 = vmatprep.subr.mxu0 0.0
        %303 = vmatpush1.msra.mxu0 0.0
        %304 = vmatprep.subr.mxu0 0.0
        %305 = vmatpush1.msra.mxu0 0.0
        %306 = vmatprep.subr.mxu0 0.0
        %307 = vmatpush1.msra.mxu0 0.0
        %308 = vmatprep.subr.mxu0 0.0
        %309 = vmatpush1.msra.mxu0 0.0
        %310 = vmatprep.subr.mxu0 0.0
        %311 = vmatpush1.msra.mxu0 0.0
        %312 = vmatprep.subr.mxu0 0.0
        %313 = vmatpush1.msra.mxu0 0.0
        %314 = vmatprep.subr.mxu0 0.0
        %315 = vmatpush1.msra.mxu0 0.0
        %316 = vmatprep.subr.mxu0 0.0
        %317 = vmatpush1.msra.mxu0 0.0
        %318 = vmatprep.subr.mxu0 0.0
        %319 = vmatpush1.msra.mxu0 0.0
        %320 = vmatprep.subr.mxu0 0.0
        %321 = vmatpush1.msra.mxu0 0.0
        %322 = vmatprep.subr.mxu0 0.0
        %323 = vmatpush1.msra.mxu0 0.0
        %324 = vmatprep.subr.mxu0 0.0
        %325 = vmatpush1.msra.mxu0 0.0
        %326 = vmatprep.subr.mxu0 0.0
        %327 = vmatpush1.msra.mxu0 0.0
        %328 = vmatprep.subr.mxu0 0.0
        %329 = vmatpush1.msra.mxu0 0.0
        %330 = vmatprep.subr.mxu0 0.0
        %331 = vmatpush1.msra.mxu0 0.0
        %332 = vmatprep.subr.mxu0 0.0
        %333 = vmatpush1.msra.mxu0 0.0
        %334 = vmatprep.subr.mxu0 0.0
        %335 = vmatpush1.msra.mxu0 0.0
        %336 = vmatprep.subr.mxu0 0.0
        %337 = vmatpush1.msra.mxu0 0.0
        %338 = vmatprep.subr.mxu0 0.0
        %339 = vmatpush1.msra.mxu0 0.0
        %340 = vmatprep.subr.mxu0 0.0
        %341 = vmatpush1.msra.mxu0 0.0
        %342 = vmatprep.subr.mxu0 0.0
        %343 = vmatpush1.msra.mxu0 0.0
        %344 = vmatprep.mubr.f32.mxu0 0.0
        %345 = vmatmul.mubr.f32.gmra.mrb[0].mxu0 %v278
        %v346 = vpop.f32.mrb[0].mxu0
        %v347 = vadd.f32 %v274, %v346
        %v348 = vpop.f32.mrb[0].mxu0
        %349 = vdwg.mxu0
        %v350 = vxor.u32 %v347, 2147483648
        %v351 = vmul.f32 %v350, 1.442695
        %v352 = vpow.pop %v351
        %v353 = vadd.f32 %v352, 1.0
        %v354 = vrcp.pop %v353
        %v355 = vmul.f32 1.0, %v354
        %v356 = vtanh.pop %v347
        %v357 = vld [vmem:[%s221] sm:$0xff]
        %359 = vrot.lane.b32.xlu0 %v356, 96
        %v360 = vpop.permute.xlu0 %359
        %v362 = vmul.f32 %v355, %v360
        %v363 = vadd.f32 %v357, %v362
        %364 = vst.msk [vmem:[%s263] sm:$0xff] %vm276, %v363
        %s365 = sand.u32 %s126, 1
        %s366 = scalar_lea.sflag [#allocation4], %s365
        %s367 = sand.u32 %s126, 1
        %s368 = smul.addr %s367, 8
        %s369 = scalar_lea.vmem [#allocation8], %s368
        // Predicated region
        $region49: #{tpu_custom_call.1} parent=35 // pred_check
          %p370 = pneg %p136
        $region50: #{tpu_custom_call.1} parent=35 // pred_check_branch
          %372 = sbr.rel (%p370) target = $region52
        $region51: #{tpu_custom_call.1} parent=35 // pred_region
          %s374 = ssub.s32 128, 128
          %375 = vsyncadd %s366, %s374
          %s376 = smul.addr %s24, 128
          %s377 = scalar_lea.hbm %s4, %s376
          %s379 = sshll.u32 %s369, 4
          %s380 = int_to_ptr.vmem [resolvable:$true] %s379
          %382 = dma.vmem_to_hbm [thread:$0]  %s380, 128, %s377, %s366
        $region52: #{tpu_custom_call.1} parent=35 // pred_fallthru
          _
      $region36: #{tpu_custom_call.1} parent=5 // pred_fallthru
        _
      %p383 = scmp.le.s32.totalorder 2, %s19
      // Predicated region
      $region53: #{tpu_custom_call.1} parent=5 // pred_check
        %p384 = pneg %p383
      $region54: #{tpu_custom_call.1} parent=5 // pred_check_branch
        %386 = sbr.rel (%p384) target = $region56
      $region55: #{tpu_custom_call.1} parent=5 // pred_region
        %s387 = ssub.s32 %s19, 2
        // Predicated region
        $region57: #{tpu_custom_call.1} parent=55 // pred_check
          %p388 = pneg %p142
        $region58: #{tpu_custom_call.1} parent=55 // pred_check_branch
          %390 = sbr.rel (%p388) target = $region60
        $region59: #{tpu_custom_call.1} parent=55 // pred_region
          %s391 = sand.u32 %s127, 1
          %s392 = scalar_lea.sflag [#allocation4], %s391
          %s393 = sand.u32 %s127, 1
          %s394 = smul.addr %s393, 8
          %s395 = scalar_lea.vmem [#allocation8], %s394
          %396 = dma.done %s392, 128
        $region60: #{tpu_custom_call.1} parent=55 // pred_fallthru
          _
      $region56: #{tpu_custom_call.1} parent=5 // pred_fallthru
        _
    $region6: #{tpu_custom_call.1} parent=1 // loop_footer
      %s23 = sadd.s32 1, %s19
    $region7: #{tpu_custom_call.1} parent=1 // loop_footer_branch
      %18 = sbr.rel target = $region3
    $region8: #{tpu_custom_call.1} parent=1 // loop_exit
      _
    %397 = vsyncpa [#allocation3], 1
    %s398 = scalar_lea.sflag [#allocation3], 1
    %399 = vsyncpa %s398, 1
    %400 = vsyncpa [#allocation6], 1
    %s401 = scalar_lea.sflag [#allocation6], 1
    %402 = vsyncpa %s401, 1
    %403 = vsyncpa [#allocation4], 1
    %s404 = scalar_lea.sflag [#allocation4], 1
    %405 = vsyncpa %s404, 1

</llo_original>
